<compile_context>
chip_gen: v6e
topology: v6e:2x2x1
jax: 0.10.0
libtpu: 0.0.40
codegen_flags: <defaults>
</compile_context>

<pallas_src>
import jax
import jax.numpy as jnp
from jax.experimental import pallas as pl
from jax.experimental.pallas import tpu as pltpu


_MAX_DMA_CHUNKS = 4          # cap on concurrent DMAs
_MIN_CHUNK_BYTES = 1 << 20   # don't bother splitting below ~1 MiB per chunk


def _sublane(itemsize: int) -> int:
    # Packed sublane group: 8 rows (4-byte), 16 (2-byte), 32 (1-byte).
    return max(8, 32 // max(1, itemsize))


def _round_up(x: int, m: int) -> int:
    return ((x + m - 1) // m) * m


def _make_prefix_copy_kernel(rows: int, n_chunks: int, chunk_rows: int):
    """Kernel: out[:rows] = src[:rows] via direct HBM->HBM DMA chunks."""

    def kernel(src_hbm, out_hbm, sems):
        copies = []
        # Static Python loop: start every chunk DMA first, then wait on all of
        # them, so the chunks run concurrently on the DMA engines.
        for c in range(n_chunks):
            start = c * chunk_rows
            size = min(chunk_rows, rows - start)
            cp = pltpu.make_async_copy(
                src_hbm.at[pl.ds(start, size), :],
                out_hbm.at[pl.ds(start, size), :],
                sems.at[c],
            )
            cp.start()
            copies.append(cp)
        for cp in copies:
            cp.wait()

    return kernel


def absolute_positional_embedding(x, emb_weight):
    """Returns emb_weight[arange(x.shape[1])]  -> (seq_len, dim)."""
    seq_len = x.shape[1]
    max_seq_len, dim = emb_weight.shape
    assert seq_len <= max_seq_len, "seq_len exceeds max_seq_len"

    if seq_len == 0:  # degenerate case: nothing to copy
        return jnp.zeros((0, dim), dtype=emb_weight.dtype)

    itemsize = jnp.dtype(emb_weight.dtype).itemsize
    sub = _sublane(itemsize)

    # Copy a sublane-aligned number of rows (never exceeding the table) so all
    # DMA windows are tile-aligned; trim to seq_len in the wrapper if padded.
    rows_copy = min(_round_up(seq_len, sub), max_seq_len)
    copy_bytes = rows_copy * dim * itemsize

    # Split large copies into a few aligned chunks for concurrent DMA queues.
    if rows_copy % sub == 0:
        n_chunks = int(max(1, min(_MAX_DMA_CHUNKS, copy_bytes // _MIN_CHUNK_BYTES)))
        chunk_rows = _round_up(pl.cdiv(rows_copy, n_chunks), sub)
        n_chunks = pl.cdiv(rows_copy, chunk_rows)
    else:
        # rows_copy == max_seq_len and the table itself is ragged: one DMA
        # spanning the whole (prefix of the) ref is the safe choice.
        n_chunks, chunk_rows = 1, rows_copy

    kernel = _make_prefix_copy_kernel(rows_copy, n_chunks, chunk_rows)

    out = pl.pallas_call(
        kernel,
        out_shape=jax.ShapeDtypeStruct((rows_copy, dim), emb_weight.dtype),
        in_specs=[pl.BlockSpec(memory_space=pl.ANY)],   # table stays in HBM
        out_specs=pl.BlockSpec(memory_space=pl.ANY),    # output written via DMA
        scratch_shapes=[pltpu.SemaphoreType.DMA((n_chunks,))],
        cost_estimate=pl.CostEstimate(
            flops=0, transcendentals=0, bytes_accessed=2 * copy_bytes),
    )(emb_weight)

    # Trim the (rare) sublane-alignment padding; no-op in the aligned case.
    return out if rows_copy == seq_len else out[:seq_len]


if __name__ == "__main__":
    key = jax.random.PRNGKey(0)
    k_w1, k_w2, k_w3 = jax.random.split(key, 3)

    # Case 1: small dim (< 128), aligned seq_len.
    batch, seq_len, dim, max_seq_len = 2, 8, 32, 64
    w1 = jax.random.normal(k_w1, (max_seq_len, dim), dtype=jnp.float32)
    x1 = jnp.zeros((batch, seq_len, dim), dtype=jnp.float32)
    out1 = jax.block_until_ready(absolute_positional_embedding(x1, w1))
    ref1 = w1[jnp.arange(seq_len)]
    assert out1.shape == (seq_len, dim)
    assert out1.dtype == jnp.float32
    assert jnp.array_equal(out1, ref1), "mismatch (dim < 128 path)"

    # Case 2: dim multiple of 128.
    w2 = jax.random.normal(k_w2, (32, 128), dtype=jnp.float32)
    x2 = jnp.zeros((batch, 16, 128), dtype=jnp.float32)
    out2 = jax.block_until_ready(absolute_positional_embedding(x2, w2))
    assert out2.shape == (16, 128)
    assert jnp.array_equal(out2, w2[:16]), "mismatch (dim % 128 == 0 path)"

    # Case 3: ragged seq_len + awkward dim -> aligned-DMA-then-trim path.
    w3 = jax.random.normal(k_w3, (24, 40), dtype=jnp.float32)
    x3 = jnp.zeros((batch, 13, 40), dtype=jnp.float32)
    out3 = jax.block_until_ready(absolute_positional_embedding(x3, w3))
    assert out3.shape == (13, 40)
    assert jnp.array_equal(out3, w3[:13]), "mismatch (ragged seq_len path)"

    print("KERNEL_OK")
</pallas_src>

<mosaic_0001>
module attributes {stable_mosaic.version = 11 : i64} {
  func.func @kernel(%arg0: memref<64x32xf32, #tpu.memory_space<any>>, %arg1: memref<8x32xf32, #tpu.memory_space<any>>, %arg2: memref<1x!tpu.dma_semaphore, #tpu.memory_space<semaphore_mem>>) attributes {dimension_semantics = [], scalar_prefetch = 0 : i64, scratch_operands = 1 : i64, tpu.core_type = #tpu.core_type<tc>} {
    %c0_i32 = arith.constant 0 : i32
    %c0_i32_0 = arith.constant 0 : i32
    %c0_i32_1 = arith.constant 0 : i32
    %0 = tpu.memref_slice %arg0[%c0_i32_0, %c0_i32_1] : memref<64x32xf32, #tpu.memory_space<any>> -> memref<8x32xf32, #tpu.memory_space<any>>
    %c0_i32_2 = arith.constant 0 : i32
    %c0_i32_3 = arith.constant 0 : i32
    %1 = tpu.memref_slice %arg1[%c0_i32_2, %c0_i32_3] : memref<8x32xf32, #tpu.memory_space<any>> -> memref<8x32xf32, #tpu.memory_space<any>>
    %2 = tpu.memref_slice %arg2[%c0_i32] : memref<1x!tpu.dma_semaphore, #tpu.memory_space<semaphore_mem>> -> memref<1x!tpu.dma_semaphore, #tpu.memory_space<semaphore_mem>>
    %3 = tpu.memref_squeeze %2 : memref<1x!tpu.dma_semaphore, #tpu.memory_space<semaphore_mem>> -> memref<!tpu.dma_semaphore, #tpu.memory_space<semaphore_mem>>
    tpu.enqueue_dma source(%0 : memref<8x32xf32, #tpu.memory_space<any>>) target(%1 : memref<8x32xf32, #tpu.memory_space<any>>) target_semaphore(%3 : memref<!tpu.dma_semaphore, #tpu.memory_space<semaphore_mem>>)
    %c0_i32_4 = arith.constant 0 : i32
    %c0_i32_5 = arith.constant 0 : i32
    %c0_i32_6 = arith.constant 0 : i32
    %4 = tpu.memref_slice %arg0[%c0_i32_5, %c0_i32_6] : memref<64x32xf32, #tpu.memory_space<any>> -> memref<8x32xf32, #tpu.memory_space<any>>
    %c0_i32_7 = arith.constant 0 : i32
    %c0_i32_8 = arith.constant 0 : i32
    %5 = tpu.memref_slice %arg1[%c0_i32_7, %c0_i32_8] : memref<8x32xf32, #tpu.memory_space<any>> -> memref<8x32xf32, #tpu.memory_space<any>>
    %6 = tpu.memref_slice %arg2[%c0_i32_4] : memref<1x!tpu.dma_semaphore, #tpu.memory_space<semaphore_mem>> -> memref<1x!tpu.dma_semaphore, #tpu.memory_space<semaphore_mem>>
    %7 = tpu.memref_squeeze %6 : memref<1x!tpu.dma_semaphore, #tpu.memory_space<semaphore_mem>> -> memref<!tpu.dma_semaphore, #tpu.memory_space<semaphore_mem>>
    tpu.wait_dma2 semaphore(%7 : memref<!tpu.dma_semaphore, #tpu.memory_space<semaphore_mem>>) src(%4 : memref<8x32xf32, #tpu.memory_space<any>>) dst(%5 : memref<8x32xf32, #tpu.memory_space<any>>)
    return
  }
}

</mosaic_0001>

<llo_original>
// kernel: tpu_custom_call.1
$region0: #{tpu_custom_call.1}
  #allocation0 [shape = 'u32[]', space=smem, size = 0x4, offset = 0x4, fixed_abs, tag = 'smem constant byte address 0x4 - core index']
  #allocation1 [shape = 'u32[144,128]{1,0:T(1,128)}', space=vmem, size = 0x12000, scoped, tag = 'internal scratch']
  #allocation2 [shape = 's32[1]{0}', space=sflag, size = 0x4, scoped, tag = 'scratch operand']
  #allocation3 [shape = 's32[]', space=sflag, size = 0x4, offset = 0, fixed_abs, tag = 'sflag constant byte address 0x0 - dummy sync flag']
  #allocation4 [shape = 's32[]', space=sflag, size = 0x4, offset = 0, fixed_abs, tag = 'sflag constant byte address 0x0 - dummy sync flag']
  #allocation5 [shape = 'u32[]', space=smem, size = 0x4, offset = 0x44, fixed_abs, tag = 'smem constant byte address 0x44 - assertion arg 0']
  #allocation6 [shape = 'u32[]', space=smem, size = 0x4, offset = 0x48, fixed_abs, tag = 'smem constant byte address 0x48 - assertion arg 1']
  %s0 = inlined_call_operand.vmem [shape: f32[64,32], index: 0, kind: input, shape index: {}]
  %s1 = inlined_call_operand.hbm [shape: f32[8,32], index: 1, kind: output, shape index: {}]
  %s2 = sld [smem:[#allocation0]]
  $region6: #{tpu_custom_call.1} parent=0
    _
  %s4 = ssub.s32 1, %s2
  %s5 = scalar_select 0, %s4, %s2
  // Predicated region
  $region2: #{tpu_custom_call.1} parent=0 // pred_check
    _
  $region3: #{tpu_custom_call.1} parent=0 // pred_check_branch
    %7 = sbr.rel target = $region5
  $region4: #{tpu_custom_call.1} parent=0 // pred_region
    %8 = sst [smem:[#allocation5]] [#allocation4]
    %9 = sst [smem:[#allocation6]] [#allocation3]
  $region5: #{tpu_custom_call.1} parent=0 // pred_fallthru
    _
  %11 = shalt.err (0)
  %s13 = sshll.u32 %s0, 4
  %s14 = int_to_ptr.vmem [resolvable:$true] %s13
  %16 = dma.vmem_to_hbm [thread:$0]  %s14, 128, %s1, [#allocation2]
  %s17 = smul.u32 8, 1
  %s18 = sshll.u32 %s17, 4
  %19 = dma.done [#allocation2], %s18
  %20 = vsyncmov [#allocation2]
  %s21 = vpop.sfrf %20
  %p22 = scmp.eq.s32.totalorder %s21, 0
  %p23 = pneg %p22
  %25 = shalt.err (%p23)

</llo_original>
